<compile_context>
chip_gen: v7x
topology: tpu7x:2x2x1
jax: 0.10.0
libtpu: 0.0.40
codegen_flags: <defaults>
</compile_context>

<pallas_src>
import functools

import jax
import jax.numpy as jnp
from jax.experimental import pallas as pl
from jax.experimental.pallas import tpu as pltpu

_LANE = 128
# Double-buffered input blocks + f32 accumulator budget; safely under the
# v5e 16 MiB / v6e 32 MiB / v7x 32 MiB scoped-VMEM defaults (no override needed).
_VMEM_BUDGET_BYTES = 10 * 1024 * 1024


def _recon_loss_kernel(p_ref, x_ref, y_ref, o_ref, acc_ref, *, batch, inv_batch):
    # p_ref:   (N, TB) VMEM -- halting probs p
    # x_ref:   (N, TB) VMEM -- per-step logits y_hat
    # y_ref:   (1, TB) VMEM -- targets in {0,1}, broadcast over N
    # o_ref:   (1, 1)  SMEM -- per-core partial (already scaled by 1/B)
    # acc_ref: (N, TB) VMEM -- f32 running accumulator across batch tiles
    i = pl.program_id(1)
    tb = p_ref.shape[-1]

    @pl.when(i == 0)
    def _init():
        acc_ref[...] = jnp.zeros_like(acc_ref)

    p = p_ref[...].astype(jnp.float32)        # (N, TB)
    x = x_ref[...].astype(jnp.float32)        # (N, TB)
    y = y_ref[...].astype(jnp.float32)        # (1, TB) -> broadcasts over N

    # BCEWithLogits (reduction='none'), numerically stable form:
    #   max(x, 0) - x*y + log1p(exp(-|x|))
    # exp/log1p land on the EUP slot; the kernel is HBM-bound, so they are free.
    loss = jnp.maximum(x, 0.0) - x * y + jnp.log1p(jnp.exp(-jnp.abs(x)))

    # Ragged-tail / clamped-tile mask based on the *logical* global lane offset.
    # Mask the product explicitly (do NOT rely on p == 0): the OOB tail of a
    # partial block contains garbage and 0*inf = NaN.
    t_logical = pl.program_id(0) * pl.num_programs(1) + i
    lane = jax.lax.broadcasted_iota(jnp.int32, (1, tb), 1)
    valid = (t_logical * tb + lane) < batch

    # Pure VPU add into the VMEM accumulator (no per-step cross-lane reduce).
    acc_ref[...] += jnp.where(valid, p * loss, 0.0)

    @pl.when(i == pl.num_programs(1) - 1)
    def _finalize():
        # One cross-lane reduce + one SMEM scalar write per core.
        o_ref[0, 0] = jnp.sum(acc_ref[...]) * inv_batch


def reconstruction_loss(p, y_hat, y, *, max_block_b=None):
    """p: [N, B], y_hat: [N, B] logits, y: [B] targets -> scalar float32 loss."""
    N, B = p.shape
    assert y_hat.shape == (N, B) and y.shape == (B,)

    y2 = y.reshape(1, B)  # metadata-only reshape, no HBM copy

    isz_p = jnp.dtype(p.dtype).itemsize
    isz_x = jnp.dtype(y_hat.dtype).itemsize
    isz_y = jnp.dtype(y2.dtype).itemsize

    # VMEM bytes per batch lane: 2x (double-buffer) for each input block + f32 acc.
    bytes_per_lane = 2 * N * (isz_p + isz_x) + 2 * isz_y + 4 * N
    tb_max = (_VMEM_BUDGET_BYTES // bytes_per_lane) // _LANE * _LANE
    tb_max = max(tb_max, _LANE)
    if max_block_b is not None:           # test/debug hook to force small tiles
        assert max_block_b % _LANE == 0
        tb_max = min(tb_max, max_block_b)

    b_lanes = pl.cdiv(B, _LANE) * _LANE
    if b_lanes <= tb_max:
        # Whole problem in one block: lane dim == full array dim is always legal.
        tb, num_tiles = B, 1
    else:
        tb, num_tiles = tb_max, pl.cdiv(B, tb_max)

    # Split batch tiles across (up to) 2 TensorCores (v7x); harmless elsewhere.
    splits = 2 if num_tiles >= 2 else 1
    t_per = pl.cdiv(num_tiles, splits)

    def data_map(c, i):
        t = c * t_per + i
        if splits > 1:
            # Clamp logical tiles past the end; their lanes are zeroed in-kernel
            # by the global-offset mask, so nothing is double counted.
            t = jnp.minimum(t, num_tiles - 1)
        return (0, t)

    kernel = functools.partial(_recon_loss_kernel, batch=B, inv_batch=1.0 / B)

    out = pl.pallas_call(
        kernel,
        out_shape=jax.ShapeDtypeStruct((splits, 1), jnp.float32),
        grid=(splits, t_per),
        in_specs=[
            pl.BlockSpec((N, tb), data_map),
            pl.BlockSpec((N, tb), data_map),
            pl.BlockSpec((1, tb), data_map),
        ],
        out_specs=pl.BlockSpec((1, 1), lambda c, i: (c, 0),
                               memory_space=pltpu.MemorySpace.SMEM),
        scratch_shapes=[pltpu.VMEM((N, tb), jnp.float32)],
        compiler_params=pltpu.CompilerParams(
            # Leading axis: independent per-core partials ("parallel").
            # Trailing axis: reduction over batch tiles ("arbitrary").
            dimension_semantics=("parallel", "arbitrary"),
        ),
    )(p, y_hat, y2)

    # Sum the (<=2) per-core partials; each is already scaled by 1/B.
    return jnp.sum(out)


def reconstruction_loss_ref(p, y_hat, y):
    """Pure-JAX reference matching the PyTorch forward loop exactly."""
    x = y_hat.astype(jnp.float32)
    t = y.astype(jnp.float32)[None, :]
    loss = jnp.maximum(x, 0.0) - x * t + jnp.log1p(jnp.exp(-jnp.abs(x)))
    per_step = jnp.mean(p.astype(jnp.float32) * loss, axis=1)  # mean over batch
    return jnp.sum(per_step)                                   # loop-sum over n


if __name__ == "__main__":
    key = jax.random.PRNGKey(0)
    k1, k2, k3 = jax.random.split(key, 3)

    # --- Case 1: toy shapes implied by the module (N=8 ponder steps, batch=32),
    #             single-block fast path. ---
    N, B = 8, 32
    logits_p = jax.random.normal(k1, (N, B), dtype=jnp.float32)
    p = jax.nn.softmax(logits_p, axis=0)                       # halting probs
    y_hat = jax.random.normal(k2, (N, B), dtype=jnp.float32)   # per-step logits
    y = (jax.random.uniform(k3, (B,)) > 0.5).astype(jnp.float32)

    out = jax.block_until_ready(reconstruction_loss(p, y_hat, y))
    ref = reconstruction_loss_ref(p, y_hat, y)
    assert jnp.allclose(out, ref, rtol=1e-5, atol=1e-5), (out, ref)

    # --- Case 2: non-multiple-of-128 batch with forced small tiles to exercise
    #             the multi-tile grid, the 2-way core split (incl. clamped dummy
    #             tile), the in-kernel ragged-tail mask and the VMEM accumulator.
    N2, B2 = 8, 300
    k4, k5, k6 = jax.random.split(jax.random.PRNGKey(1), 3)
    p2 = jax.nn.softmax(jax.random.normal(k4, (N2, B2), dtype=jnp.float32), axis=0)
    yh2 = jax.random.normal(k5, (N2, B2), dtype=jnp.float32)
    y2 = (jax.random.uniform(k6, (B2,)) > 0.5).astype(jnp.float32)

    out2 = jax.block_until_ready(reconstruction_loss(p2, yh2, y2, max_block_b=128))
    ref2 = reconstruction_loss_ref(p2, yh2, y2)
    assert jnp.allclose(out2, ref2, rtol=1e-5, atol=1e-5), (out2, ref2)

    # --- Case 3: bf16 inputs pass straight through (kernel upcasts to f32). ---
    out3 = jax.block_until_ready(
        reconstruction_loss(p.astype(jnp.bfloat16), y_hat.astype(jnp.bfloat16),
                            y.astype(jnp.bfloat16)))
    ref3 = reconstruction_loss_ref(p.astype(jnp.bfloat16),
                                   y_hat.astype(jnp.bfloat16),
                                   y.astype(jnp.bfloat16))
    assert jnp.allclose(out3, ref3, rtol=1e-3, atol=1e-3), (out3, ref3)

    print("KERNEL_OK")
</pallas_src>

<mosaic_0001>
module attributes {stable_mosaic.version = 11 : i64} {
  func.func @_recon_loss_kernel(%arg0: i32, %arg1: i32, %arg2: memref<8x32xf32, #tpu.memory_space<vmem>>, %arg3: memref<8x32xf32, #tpu.memory_space<vmem>>, %arg4: memref<1x32xf32, #tpu.memory_space<vmem>>, %arg5: memref<1x1xf32, #tpu.memory_space<smem>>, %arg6: memref<8x32xf32, #tpu.memory_space<vmem>>) attributes {dimension_semantics = [#tpu.dimension_semantics<parallel>, #tpu.dimension_semantics<arbitrary>], iteration_bounds = array<i64: 1, 1>, scalar_prefetch = 0 : i64, scratch_operands = 1 : i64, tpu.core_type = #tpu.core_type<tc>, window_params = [{transform_indices = @transform_0, window_bounds = array<i64: 8, 32>}, {transform_indices = @transform_1, window_bounds = array<i64: 8, 32>}, {transform_indices = @transform_2, window_bounds = array<i64: 1, 32>}, {transform_indices = @transform_3, window_bounds = array<i64: 1, 1>}]} {
    %c0_i32 = arith.constant 0 : i32
    %0 = arith.cmpi eq, %arg1, %c0_i32 : i32
    %1 = arith.extui %0 : i1 to i32
    %c0_i32_0 = arith.constant 0 : i32
    %2 = arith.cmpi ne, %1, %c0_i32_0 : i32
    scf.if %2 {
      %cst_15 = arith.constant 0.000000e+00 : f32
      %36 = vector.broadcast %cst_15 : f32 to vector<8x32xf32>
      %c0_16 = arith.constant 0 : index
      %c0_17 = arith.constant 0 : index
      %37 = vector.load %arg6[%c0_16, %c0_17] : memref<8x32xf32, #tpu.memory_space<vmem>>, vector<8x32xf32>
      tpu.vector_store %arg6[%c0_16, %c0_17], %36 {strides = array<i32>} : memref<8x32xf32, #tpu.memory_space<vmem>>, vector<8x32xf32>,
    } else {
    }
    %c0 = arith.constant 0 : index
    %c0_1 = arith.constant 0 : index
    %3 = vector.load %arg2[%c0, %c0_1] : memref<8x32xf32, #tpu.memory_space<vmem>>, vector<8x32xf32>
    %c0_2 = arith.constant 0 : index
    %c0_3 = arith.constant 0 : index
    %4 = vector.load %arg3[%c0_2, %c0_3] : memref<8x32xf32, #tpu.memory_space<vmem>>, vector<8x32xf32>
    %c0_4 = arith.constant 0 : index
    %c0_5 = arith.constant 0 : index
    %5 = vector.load %arg4[%c0_4, %c0_5] : memref<1x32xf32, #tpu.memory_space<vmem>>, vector<1x32xf32>
    %cst = arith.constant 0.000000e+00 : f32
    %6 = vector.broadcast %cst : f32 to vector<8x32xf32>
    %7 = arith.maximumf %4, %6 : vector<8x32xf32>
    %8 = vector.broadcast %5 : vector<1x32xf32> to vector<8x32xf32>
    %9 = arith.mulf %4, %8 : vector<8x32xf32>
    %10 = arith.subf %7, %9 : vector<8x32xf32>
    %11 = math.absf %4 : vector<8x32xf32>
    %cst_6 = arith.constant 0.000000e+00 : f32
    %12 = vector.broadcast %cst_6 : f32 to vector<8x32xf32>
    %13 = arith.subf %12, %11 : vector<8x32xf32>
    %14 = math.exp %13 : vector<8x32xf32>
    %15 = math.log1p %14 : vector<8x32xf32>
    %16 = arith.addf %10, %15 : vector<8x32xf32>
    %c1_i32 = arith.constant 1 : i32
    %17 = arith.muli %arg0, %c1_i32 : i32
    %18 = arith.addi %17, %arg1 : i32
    %19 = tpu.iota {dimensions = array<i32: 1>} : vector<1x32xi32>
    %c32_i32 = arith.constant 32 : i32
    %20 = arith.muli %18, %c32_i32 : i32
    %21 = vector.broadcast %20 : i32 to vector<1x32xi32>
    %22 = arith.addi %21, %19 : vector<1x32xi32>
    %c32_i32_7 = arith.constant 32 : i32
    %23 = vector.broadcast %c32_i32_7 : i32 to vector<1x32xi32>
    %24 = arith.cmpi slt, %22, %23 : vector<1x32xi32>
    %c0_8 = arith.constant 0 : index
    %c0_9 = arith.constant 0 : index
    %25 = vector.load %arg6[%c0_8, %c0_9] : memref<8x32xf32, #tpu.memory_space<vmem>>, vector<8x32xf32>
    %26 = arith.mulf %3, %16 : vector<8x32xf32>
    %cst_10 = arith.constant 0.000000e+00 : f32
    %27 = vector.shape_cast %24 : vector<1x32xi1> to vector<1x32xi1>
    %28 = vector.broadcast %27 : vector<1x32xi1> to vector<8x32xi1>
    %29 = vector.broadcast %cst_10 : f32 to vector<8x32xf32>
    %30 = arith.select %28, %26, %29 : vector<8x32xi1>, vector<8x32xf32>
    %31 = arith.addf %25, %30 : vector<8x32xf32>
    %c0_11 = arith.constant 0 : index
    %c0_12 = arith.constant 0 : index
    %32 = vector.load %arg6[%c0_11, %c0_12] : memref<8x32xf32, #tpu.memory_space<vmem>>, vector<8x32xf32>
    tpu.vector_store %arg6[%c0_11, %c0_12], %31 {strides = array<i32>} : memref<8x32xf32, #tpu.memory_space<vmem>>, vector<8x32xf32>,
    %c0_i32_13 = arith.constant 0 : i32
    %33 = arith.cmpi eq, %arg1, %c0_i32_13 : i32
    %34 = arith.extui %33 : i1 to i32
    %c0_i32_14 = arith.constant 0 : i32
    %35 = arith.cmpi ne, %34, %c0_i32_14 : i32
    scf.if %35 {
      %c0_15 = arith.constant 0 : index
      %c0_16 = arith.constant 0 : index
      %36 = vector.load %arg6[%c0_15, %c0_16] : memref<8x32xf32, #tpu.memory_space<vmem>>, vector<8x32xf32>
      %37 = vector.shape_cast %36 : vector<8x32xf32> to vector<1x8x32xf32>
      %cst_17 = arith.constant dense<0.000000e+00> : vector<1xf32>
      %38 = vector.multi_reduction <add>, %37, %cst_17 [1, 2] : vector<1x8x32xf32> to vector<1xf32>
      %39 = vector.shape_cast %38 : vector<1xf32> to vector<1x1x1xf32>
      %40 = vector.extract %39[0, 0, 0] : f32 from vector<1x1x1xf32>
      %cst_18 = arith.constant 3.125000e-02 : f32
      %41 = arith.mulf %40, %cst_18 : f32
      %c0_19 = arith.constant 0 : index
      %c0_20 = arith.constant 0 : index
      %42 = memref.load %arg5[%c0_19, %c0_20] : memref<1x1xf32, #tpu.memory_space<smem>>
      memref.store %41, %arg5[%c0_19, %c0_20] : memref<1x1xf32, #tpu.memory_space<smem>>
    } else {
    }
    return
  }
  func.func @transform_0(%arg0: i32, %arg1: i32) -> (i32, i32) {
    %c1_i32 = arith.constant 1 : i32
    %0 = arith.muli %arg0, %c1_i32 : i32
    %1 = arith.addi %0, %arg1 : i32
    %c0_i32 = arith.constant 0 : i32
    %c0_i32_0 = arith.constant 0 : i32
    return %c0_i32, %1 : i32, i32
  }
  func.func @transform_1(%arg0: i32, %arg1: i32) -> (i32, i32) {
    %c1_i32 = arith.constant 1 : i32
    %0 = arith.muli %arg0, %c1_i32 : i32
    %1 = arith.addi %0, %arg1 : i32
    %c0_i32 = arith.constant 0 : i32
    %c0_i32_0 = arith.constant 0 : i32
    return %c0_i32, %1 : i32, i32
  }
  func.func @transform_2(%arg0: i32, %arg1: i32) -> (i32, i32) {
    %c1_i32 = arith.constant 1 : i32
    %0 = arith.muli %arg0, %c1_i32 : i32
    %1 = arith.addi %0, %arg1 : i32
    %c0_i32 = arith.constant 0 : i32
    %c0_i32_0 = arith.constant 0 : i32
    return %c0_i32, %1 : i32, i32
  }
  func.func @transform_3(%arg0: i32, %arg1: i32) -> (i32, i32) {
    %c0_i32 = arith.constant 0 : i32
    %c0_i32_0 = arith.constant 0 : i32
    return %arg0, %c0_i32 : i32, i32
  }
}

</mosaic_0001>

<llo_original>
// kernel: tpu_custom_call.1
$region0: #{tpu_custom_call.1}
  #allocation0 [shape = 'u32[]', space=smem, size = 0x4, offset = 0x4, fixed_abs, tag = 'smem constant byte address 0x4 - core index']
  #allocation1 [shape = 'u32[144,128]{1,0:T(1,128)}', space=vmem, size = 0x12000, scoped, tag = 'internal scratch']
  #allocation2 [shape = 'f32[8,32]{1,0:T(8,128)}', space=vmem, size = 0x1000, scoped, tag = 'scratch operand']
  %s0 = inlined_call_operand.hbm [shape: f32[8,32], index: 0, kind: input, shape index: {}]
  %s1 = inlined_call_operand.hbm [shape: f32[8,32], index: 1, kind: input, shape index: {}]
  %s2 = inlined_call_operand.vmem [shape: f32[1,32], index: 2, kind: input, shape index: {}]
  %s3 = inlined_call_operand.hbm [shape: f32[1,1], index: 3, kind: output, shape index: {}]
  %s4 = sld [smem:[#allocation0]]
  $region38: #{tpu_custom_call.1} parent=0
    _
  %s6 = ssub.s32 1, %s4
  %s7 = scalar_select 0, %s6, %s4
  $region1: #{tpu_custom_call.1} parent=0
    #allocation3 [shape = 'u8[4096]{0}', space=vmem, size = 0x1000, scoped, tag = 'input window, operand 0, single buffered']
    #allocation4 [shape = 's32[1]{0}', space=sflag, size = 0x4, scoped, tag = 'scoped memory for tpu_custom_call.1']
    #allocation5 [shape = 's32[1]{0}', space=sflag, size = 0x4, scoped, tag = 'scoped memory for tpu_custom_call.1']
    #allocation6 [shape = 'u8[4096]{0}', space=vmem, size = 0x1000, scoped, tag = 'input window, operand 1, single buffered']
    #allocation7 [shape = 's32[1]{0}', space=sflag, size = 0x4, scoped, tag = 'scoped memory for tpu_custom_call.1']
    #allocation8 [shape = 'u8[512]{0}', space=smem, size = 0x200, scoped, tag = 'output window, operand 0, single buffered']
    %8 = vsyncpa [#allocation4], 0
    %9 = vsyncpa [#allocation7], 0
    %10 = vsyncpa [#allocation5], 0
    // Predicated region
    $region2: #{tpu_custom_call.1} parent=1 // pred_check
      _
    $region3: #{tpu_custom_call.1} parent=1 // pred_check_branch
      %12 = sbr.rel (0) target = $region5
    $region4: #{tpu_custom_call.1} parent=1 // pred_region
      %s13 = sadd.s32 0, 0
      %s15 = ssub.s32 128, 128
      %16 = vsyncadd [#allocation4], %s15
      %s17 = smul.addr %s13, 128
      %s18 = scalar_lea.hbm %s0, %s17
      %s20 = sshll.u32 [#allocation3], 4
      %s21 = int_to_ptr.vmem [resolvable:$true] %s20
      %23 = dma.hbm_to_vmem [thread:$0]  %s18, 128, %s21, [#allocation4]
    $region5: #{tpu_custom_call.1} parent=1 // pred_fallthru
      _
    // Predicated region
    $region6: #{tpu_custom_call.1} parent=1 // pred_check
      _
    $region7: #{tpu_custom_call.1} parent=1 // pred_check_branch
      %25 = sbr.rel (0) target = $region9
    $region8: #{tpu_custom_call.1} parent=1 // pred_region
      %s26 = sadd.s32 0, 0
      %s28 = ssub.s32 128, 128
      %29 = vsyncadd [#allocation7], %s28
      %s30 = smul.addr %s26, 128
      %s31 = scalar_lea.hbm %s1, %s30
      %s33 = sshll.u32 [#allocation6], 4
      %s34 = int_to_ptr.vmem [resolvable:$true] %s33
      %36 = dma.hbm_to_vmem [thread:$0]  %s31, 128, %s34, [#allocation7]
    $region9: #{tpu_custom_call.1} parent=1 // pred_fallthru
      _
    // Predicated region
    $region10: #{tpu_custom_call.1} parent=1 // pred_check
      _
    $region11: #{tpu_custom_call.1} parent=1 // pred_check_branch
      %38 = sbr.rel (0) target = $region13
    $region12: #{tpu_custom_call.1} parent=1 // pred_region
      %s39 = sadd.s32 0, 0
      %p40 = scmp.lt.s32.totalorder %s39, 0
      %s41 = scalar_select %p40, %s39, 0
      %s42 = scalar_lea.vmem %s2, %s41
      %s43 = sadd.s32 0, 0
    $region13: #{tpu_custom_call.1} parent=1 // pred_fallthru
      _
    // Predicated region
    $region14: #{tpu_custom_call.1} parent=1 // pred_check
      _
    $region15: #{tpu_custom_call.1} parent=1 // pred_check_branch
      %45 = sbr.rel (0) target = $region17
    $region16: #{tpu_custom_call.1} parent=1 // pred_region
      %46 = dma.done [#allocation4], 128
    $region17: #{tpu_custom_call.1} parent=1 // pred_fallthru
      _
    // Predicated region
    $region18: #{tpu_custom_call.1} parent=1 // pred_check
      _
    $region19: #{tpu_custom_call.1} parent=1 // pred_check_branch
      %48 = sbr.rel (0) target = $region21
    $region20: #{tpu_custom_call.1} parent=1 // pred_region
      %49 = dma.done [#allocation7], 128
    $region21: #{tpu_custom_call.1} parent=1 // pred_fallthru
      _
    %s50 = sadd.s32 0, 0
    %p51 = scmp.lt.s32.totalorder %s50, 0
    %s52 = scalar_select %p51, %s50, 0
    %s53 = scalar_lea.vmem %s2, %s52
    %s54 = sadd.s32 0, 0
    %s55 = sadd.s32 0, 0
    %s56 = sadd.s32 0, 0
    %p57 = scmp.lt.s32.totalorder %s56, 0
    %s58 = scalar_select %p57, %s56, 0
    %s59 = scalar_lea.vmem %s2, %s58
    %s60 = sadd.s32 0, 0
    %p61 = scmp.eq.s32.totalorder 0, 0
    // Predicated region
    $region22: #{tpu_custom_call.1} parent=1 // pred_check
      %p62 = pneg %p61
    $region23: #{tpu_custom_call.1} parent=1 // pred_check_branch
      %64 = sbr.rel (%p62) target = $region25
    $region24: #{tpu_custom_call.1} parent=1 // pred_region
      %vm65 = vcmask 261120
      %66 = vst.msk [vmem:[#allocation2] sm:$0xff] %vm65, 0.0
    $region25: #{tpu_custom_call.1} parent=1 // pred_fallthru
      _
    %v67 = vld [vmem:[#allocation3] sm:$0xff]
    %v68 = vld [vmem:[#allocation6] sm:$0xff]
    %v69 = vld [vmem:[%s59] sm:$0x1]
    %v70 = vmax.f32 %v68, 0.0
    %v72 = vlaneseq
    %v73 = vshrl.u32 %v72, 7
    %v74 = vsub.s32 0, %v73
    %v75 = vrot.slane %v69, %v74
    %v77 = vmul.f32 %v68, %v75
    %v78 = vsub.f32 %v70, %v77
    %v79 = vand.u32 2147483647, %v68
    %v80 = vsub.f32 0.0, %v79
    %v81 = vmul.f32 %v80, 1.442695
    %v82 = vpow.pop %v81
    %v83 = vadd.f32 %v82, 1.0
    %v84 = vlog2.pop %v83
    %v85 = vmul.f32 %v84, 0.6931472
    %v86 = vmul.f32 -0.5, %v82
    %v87 = vadd.f32 %v86, 1.0
    %v88 = vmul.f32 %v87, %v82
    %v89 = vand.u32 2147483647, %v82
    %vm90 = vcmp.lt.f32.partialorder %v89, 0.0004427343
    %v91 = vsel %vm90, %v88, %v85
    %v92 = vadd.f32 %v78, %v91
    %s93 = sadd.s32 0, 0
    %v94 = vlaneseq
    %v95 = vand.u32 %v94, 127
    %s96 = smul.u32 %s93, 32
    %v97 = vstv %s96
    %v98 = vadd.s32 %v97, %v95
    %vm99 = vcmp.lt.s32.totalorder %v98, 32
    %v100 = vld [vmem:[#allocation2] sm:$0xff]
    %v101 = vmul.f32 %v67, %v92
    %v102 = vsel %vm99, 1, 0
    %vm103 = vcmp.eq.s32.totalorder %v102, 1
    %v104 = vsel %vm103, %v101, 0.0
    %v105 = vadd.f32 %v100, %v104
    %vm106 = vcmask 261120
    %107 = vst.msk [vmem:[#allocation2] sm:$0xff] %vm106, %v105
    // Predicated region
    $region26: #{tpu_custom_call.1} parent=1 // pred_check
      %p108 = pneg %p61
    $region27: #{tpu_custom_call.1} parent=1 // pred_check_branch
      %110 = sbr.rel (%p108) target = $region29
    $region28: #{tpu_custom_call.1} parent=1 // pred_region
      %v111 = vld [vmem:[#allocation2] sm:$0xff]
      %v112 = vsel %vm106, %v111, 0.0
      %113 = vadd.xlane.f32.xlu0 %v112
      %v114 = vpop.xlane.xlu0 %113
      %v115 = vrot.slane %v114, 4
      %v116 = vadd.f32 %v114, %v115
      %v117 = vrot.slane %v116, 2
      %v118 = vadd.f32 %v116, %v117
      %v119 = vrot.slane %v118, 1
      %v120 = vadd.f32 %v118, %v119
      %s121 = vtos %v120
      %s122 = smul.f32 %s121, 0.03125
      %s123 = scalar_lea.smem [#allocation8], 0
      %124 = sst [smem:[%s123]] %s122
    $region29: #{tpu_custom_call.1} parent=1 // pred_fallthru
      _
    // Predicated region
    $region30: #{tpu_custom_call.1} parent=1 // pred_check
      _
    $region31: #{tpu_custom_call.1} parent=1 // pred_check_branch
      %126 = sbr.rel (0) target = $region33
    $region32: #{tpu_custom_call.1} parent=1 // pred_region
      %s128 = ssub.s32 16, 16
      %129 = vsyncadd [#allocation5], %s128
      %132 = dma.smem_to_hbm [#allocation8], 16, %s3, [#allocation5]
    $region33: #{tpu_custom_call.1} parent=1 // pred_fallthru
      _
    // Predicated region
    $region34: #{tpu_custom_call.1} parent=1 // pred_check
      _
    $region35: #{tpu_custom_call.1} parent=1 // pred_check_branch
      %134 = sbr.rel (0) target = $region37
    $region36: #{tpu_custom_call.1} parent=1 // pred_region
      %135 = dma.done [#allocation5], 16
    $region37: #{tpu_custom_call.1} parent=1 // pred_fallthru
      _
    %136 = sfence
    %137 = vsyncpa [#allocation4], 1
    %138 = vsyncpa [#allocation7], 1
    %139 = vsyncpa [#allocation5], 1

</llo_original>
